<compile_context>
chip_gen: v7x
topology: tpu7x:2x2x1
jax: 0.10.0
libtpu: 0.0.40
codegen_flags: <defaults>
</compile_context>

<pallas_src>
import jax
import jax.numpy as jnp
import numpy as np
from jax.experimental import pallas as pl
from jax.experimental.pallas import tpu as pltpu

TILE_N = 512  # detections per grid step; multiple of 128 (lane width)


def _disappear_kernel(scalars_ref,                     # SMEM (2,) int32: [class_id, n_valid]
                      bboxes_ref,                      # VMEM [D, TILE_N] f32
                      labels_ref,                      # VMEM [1, TILE_N] int32
                      loss_ref,                        # VMEM [1, 1] f32
                      ssum_c, cnt_c, ssum_t, cnt_t):   # VMEM (1,1) f32 accumulators
    t = pl.program_id(0)

    @pl.when(t == 0)
    def _init():
        ssum_c[...] = jnp.zeros_like(ssum_c)
        cnt_c[...] = jnp.zeros_like(cnt_c)
        ssum_t[...] = jnp.zeros_like(ssum_t)
        cnt_t[...] = jnp.zeros_like(cnt_t)

    cid = scalars_ref[0]
    n_valid = scalars_ref[1]

    x = bboxes_ref[...]                                # [D, TILE_N]
    labels = labels_ref[...]                           # [1, TILE_N]
    d = x.shape[0]
    tile_n = x.shape[1]

    # Validity mask for padded lanes of the last (or only) tile.
    col = jax.lax.broadcasted_iota(jnp.int32, (1, tile_n), 1) + t * tile_n
    valid = (col < n_valid).astype(jnp.float32)        # [1, TILE_N]

    x2 = x * x

    # Branch 1: per-detection lane mask (label == class_id), implicit broadcast over D sublanes.
    lane_mask = (labels == cid).astype(jnp.float32) * valid        # [1, TILE_N]
    ssum_c[...] += jnp.sum(x2 * lane_mask, keepdims=True)          # (1, 1)
    cnt_c[...] += jnp.sum(lane_mask, keepdims=True) * d            # each matching row has D elems

    # Branch 2: per-element threshold mask.
    tmask = (x >= jnp.float32(0.01)).astype(jnp.float32) * valid   # [D, TILE_N]
    ssum_t[...] += jnp.sum(x2 * tmask, keepdims=True)
    cnt_t[...] += jnp.sum(tmask, keepdims=True)

    @pl.when(t == pl.num_programs(0) - 1)
    def _finalize():
        # Branch decision done in-kernel: class branch iff class_id != -1 and it
        # appears at least once in the labels (cnt_class > 0).
        use_class = jnp.logical_and(cid != -1, cnt_c[...] > 0.0)   # (1, 1) bool
        ssum = jnp.where(use_class, ssum_c[...], ssum_t[...])
        cnt = jnp.where(use_class, cnt_c[...], cnt_t[...])
        # Exact reciprocal (approx=False) to keep the 1e-5 tolerance vs. the reference.
        loss_ref[...] = jnp.float32(1.0) - ssum * pl.reciprocal(cnt, approx=False)


def disappear_loss(det_bboxes, det_labels, class_id, *, tile_n=TILE_N):
    """det_bboxes: [N, D] float, det_labels: [1, N] int, class_id: int (python or traced)."""
    det_bboxes = jnp.asarray(det_bboxes, jnp.float32)              # [N, D]
    labels0 = jnp.asarray(det_labels)[0].astype(jnp.int32)         # [N]
    n, d = det_bboxes.shape

    n_pad = pl.cdiv(n, tile_n) * tile_n
    num_tiles = n_pad // tile_n

    # Lane-dense layout: long N axis on the 128-lane axis, D on sublanes.
    x_t = jnp.zeros((d, n_pad), jnp.float32).at[:, :n].set(det_bboxes.T)
    lab = jnp.full((1, n_pad), -2, jnp.int32).at[0, :n].set(labels0)

    scalars = jnp.stack([jnp.asarray(class_id, jnp.int32),
                         jnp.asarray(n, jnp.int32)])               # (2,) int32, SMEM-prefetched

    out = pl.pallas_call(
        _disappear_kernel,
        out_shape=jax.ShapeDtypeStruct((1, 1), jnp.float32),
        grid_spec=pltpu.PrefetchScalarGridSpec(
            num_scalar_prefetch=1,
            grid=(num_tiles,),
            in_specs=[
                pl.BlockSpec((d, tile_n), lambda i, s: (0, i)),    # bboxes tile [D, TILE_N]
                pl.BlockSpec((1, tile_n), lambda i, s: (0, i)),    # labels tile [1, TILE_N]
            ],
            out_specs=pl.BlockSpec((1, 1), lambda i, s: (0, 0)),   # resident scalar output
            scratch_shapes=[pltpu.VMEM((1, 1), jnp.float32)] * 4,
        ),
        compiler_params=pltpu.CompilerParams(
            dimension_semantics=("arbitrary",)),                   # reduction axis
    )(scalars, x_t, lab)
    return out[0, 0]


def _reference(det_bboxes, det_labels, class_id):
    x = np.asarray(det_bboxes, dtype=np.float32)
    labels = np.asarray(det_labels[0])
    if class_id != -1 and class_id in list(labels):
        sel = np.where(labels == class_id)
        sel_x = x[sel]
        return 1.0 - np.mean(sel_x ** 2)
    else:
        sel_x = x[x >= 0.01]
        return 1.0 - np.mean(sel_x ** 2)


if __name__ == "__main__":
    key = jax.random.PRNGKey(0)
    k1, _ = jax.random.split(key)

    N, D = 8, 5
    det_bboxes = jax.random.uniform(k1, (N, D), dtype=jnp.float32)
    det_labels = jnp.array([[1, 2, 1, 3, 0, 1, 2, 3]], dtype=jnp.int32)  # [1, N]

    # Branch 1: class_id present in labels.
    loss_a = disappear_loss(det_bboxes, det_labels, class_id=1)
    jax.block_until_ready(loss_a)
    ref_a = _reference(np.asarray(det_bboxes), np.asarray(det_labels), 1)
    assert np.allclose(np.asarray(loss_a), ref_a, atol=1e-5), (loss_a, ref_a)

    # Branch 2: class_id == -1 -> threshold-mask path.
    loss_b = disappear_loss(det_bboxes, det_labels, class_id=-1)
    jax.block_until_ready(loss_b)
    ref_b = _reference(np.asarray(det_bboxes), np.asarray(det_labels), -1)
    assert np.allclose(np.asarray(loss_b), ref_b, atol=1e-5), (loss_b, ref_b)

    # Branch 2 again: class_id not present in labels.
    loss_c = disappear_loss(det_bboxes, det_labels, class_id=7)
    jax.block_until_ready(loss_c)
    ref_c = _reference(np.asarray(det_bboxes), np.asarray(det_labels), 7)
    assert np.allclose(np.asarray(loss_c), ref_c, atol=1e-5), (loss_c, ref_c)

    print("KERNEL_OK")
</pallas_src>

<mosaic_0001>
module attributes {stable_mosaic.version = 11 : i64} {
  func.func @_disappear_kernel(%arg0: i32, %arg1: memref<2xi32, #tpu.memory_space<smem>>, %arg2: memref<5x512xf32, #tpu.memory_space<vmem>>, %arg3: memref<1x512xi32, #tpu.memory_space<vmem>>, %arg4: memref<1x1xf32, #tpu.memory_space<vmem>>, %arg5: memref<1x1xf32, #tpu.memory_space<vmem>>, %arg6: memref<1x1xf32, #tpu.memory_space<vmem>>, %arg7: memref<1x1xf32, #tpu.memory_space<vmem>>, %arg8: memref<1x1xf32, #tpu.memory_space<vmem>>) attributes {dimension_semantics = [#tpu.dimension_semantics<arbitrary>], iteration_bounds = array<i64: 1>, scalar_prefetch = 1 : i64, scratch_operands = 4 : i64, tpu.core_type = #tpu.core_type<tc>, window_params = [{transform_indices = @transform_0, window_bounds = array<i64: 5, 512>}, {transform_indices = @transform_1, window_bounds = array<i64: 1, 512>}, {pipeline_mode = #tpu.pipeline_mode<synchronous>, transform_indices = @transform_2, window_bounds = array<i64: 1, 1>}]} {
    %c0_i32 = arith.constant 0 : i32
    %0 = arith.cmpi eq, %arg0, %c0_i32 : i32
    %1 = arith.extui %0 : i1 to i32
    %c0_i32_0 = arith.constant 0 : i32
    %2 = arith.cmpi ne, %1, %c0_i32_0 : i32
    scf.if %2 {
      %cst_28 = arith.constant 0.000000e+00 : f32
      %67 = vector.broadcast %cst_28 : f32 to vector<1x1xf32>
      %c0_29 = arith.constant 0 : index
      %c0_30 = arith.constant 0 : index
      %68 = vector.load %arg5[%c0_29, %c0_30] : memref<1x1xf32, #tpu.memory_space<vmem>>, vector<1x1xf32>
      tpu.vector_store %arg5[%c0_29, %c0_30], %67 {strides = array<i32>} : memref<1x1xf32, #tpu.memory_space<vmem>>, vector<1x1xf32>,
      %cst_31 = arith.constant 0.000000e+00 : f32
      %69 = vector.broadcast %cst_31 : f32 to vector<1x1xf32>
      %c0_32 = arith.constant 0 : index
      %c0_33 = arith.constant 0 : index
      %70 = vector.load %arg6[%c0_32, %c0_33] : memref<1x1xf32, #tpu.memory_space<vmem>>, vector<1x1xf32>
      tpu.vector_store %arg6[%c0_32, %c0_33], %69 {strides = array<i32>} : memref<1x1xf32, #tpu.memory_space<vmem>>, vector<1x1xf32>,
      %cst_34 = arith.constant 0.000000e+00 : f32
      %71 = vector.broadcast %cst_34 : f32 to vector<1x1xf32>
      %c0_35 = arith.constant 0 : index
      %c0_36 = arith.constant 0 : index
      %72 = vector.load %arg7[%c0_35, %c0_36] : memref<1x1xf32, #tpu.memory_space<vmem>>, vector<1x1xf32>
      tpu.vector_store %arg7[%c0_35, %c0_36], %71 {strides = array<i32>} : memref<1x1xf32, #tpu.memory_space<vmem>>, vector<1x1xf32>,
      %cst_37 = arith.constant 0.000000e+00 : f32
      %73 = vector.broadcast %cst_37 : f32 to vector<1x1xf32>
      %c0_38 = arith.constant 0 : index
      %c0_39 = arith.constant 0 : index
      %74 = vector.load %arg8[%c0_38, %c0_39] : memref<1x1xf32, #tpu.memory_space<vmem>>, vector<1x1xf32>
      tpu.vector_store %arg8[%c0_38, %c0_39], %73 {strides = array<i32>} : memref<1x1xf32, #tpu.memory_space<vmem>>, vector<1x1xf32>,
    } else {
    }
    %c0 = arith.constant 0 : index
    %3 = memref.load %arg1[%c0] : memref<2xi32, #tpu.memory_space<smem>>
    %c1 = arith.constant 1 : index
    %4 = memref.load %arg1[%c1] : memref<2xi32, #tpu.memory_space<smem>>
    %c0_1 = arith.constant 0 : index
    %c0_2 = arith.constant 0 : index
    %5 = vector.load %arg2[%c0_1, %c0_2] : memref<5x512xf32, #tpu.memory_space<vmem>>, vector<5x512xf32>
    %c0_3 = arith.constant 0 : index
    %c0_4 = arith.constant 0 : index
    %6 = vector.load %arg3[%c0_3, %c0_4] : memref<1x512xi32, #tpu.memory_space<vmem>>, vector<1x512xi32>
    %7 = tpu.iota {dimensions = array<i32: 1>} : vector<1x512xi32>
    %c512_i32 = arith.constant 512 : i32
    %8 = arith.muli %arg0, %c512_i32 : i32
    %9 = vector.broadcast %8 : i32 to vector<1x512xi32>
    %10 = arith.addi %7, %9 : vector<1x512xi32>
    %11 = vector.broadcast %4 : i32 to vector<1x512xi32>
    %12 = arith.cmpi slt, %10, %11 : vector<1x512xi32>
    %13 = arith.extui %12 : vector<1x512xi1> to vector<1x512xi32>
    %14 = arith.sitofp %13 : vector<1x512xi32> to vector<1x512xf32>
    %15 = arith.mulf %5, %5 : vector<5x512xf32>
    %16 = vector.broadcast %3 : i32 to vector<1x512xi32>
    %17 = arith.cmpi eq, %6, %16 : vector<1x512xi32>
    %18 = arith.extui %17 : vector<1x512xi1> to vector<1x512xi32>
    %19 = arith.sitofp %18 : vector<1x512xi32> to vector<1x512xf32>
    %20 = arith.mulf %19, %14 : vector<1x512xf32>
    %c0_5 = arith.constant 0 : index
    %c0_6 = arith.constant 0 : index
    %21 = vector.load %arg5[%c0_5, %c0_6] : memref<1x1xf32, #tpu.memory_space<vmem>>, vector<1x1xf32>
    %22 = vector.broadcast %20 : vector<1x512xf32> to vector<5x512xf32>
    %23 = arith.mulf %15, %22 : vector<5x512xf32>
    %24 = vector.shape_cast %23 : vector<5x512xf32> to vector<1x5x512xf32>
    %cst = arith.constant dense<0.000000e+00> : vector<1xf32>
    %25 = vector.multi_reduction <add>, %24, %cst [1, 2] : vector<1x5x512xf32> to vector<1xf32>
    %26 = vector.shape_cast %25 : vector<1xf32> to vector<1x1x1xf32>
    %27 = vector.extract %26[0, 0, 0] : f32 from vector<1x1x1xf32>
    %28 = vector.broadcast %27 : f32 to vector<1x1xf32>
    %29 = arith.addf %21, %28 : vector<1x1xf32>
    %c0_7 = arith.constant 0 : index
    %c0_8 = arith.constant 0 : index
    %30 = vector.load %arg5[%c0_7, %c0_8] : memref<1x1xf32, #tpu.memory_space<vmem>>, vector<1x1xf32>
    tpu.vector_store %arg5[%c0_7, %c0_8], %29 {strides = array<i32>} : memref<1x1xf32, #tpu.memory_space<vmem>>, vector<1x1xf32>,
    %c0_9 = arith.constant 0 : index
    %c0_10 = arith.constant 0 : index
    %31 = vector.load %arg6[%c0_9, %c0_10] : memref<1x1xf32, #tpu.memory_space<vmem>>, vector<1x1xf32>
    %32 = vector.shape_cast %20 : vector<1x512xf32> to vector<1x1x512xf32>
    %cst_11 = arith.constant dense<0.000000e+00> : vector<1xf32>
    %33 = vector.multi_reduction <add>, %32, %cst_11 [1, 2] : vector<1x1x512xf32> to vector<1xf32>
    %34 = vector.shape_cast %33 : vector<1xf32> to vector<1x1x1xf32>
    %35 = vector.extract %34[0, 0, 0] : f32 from vector<1x1x1xf32>
    %36 = vector.broadcast %35 : f32 to vector<1x1xf32>
    %cst_12 = arith.constant 5.000000e+00 : f32
    %37 = vector.broadcast %cst_12 : f32 to vector<1x1xf32>
    %38 = arith.mulf %36, %37 : vector<1x1xf32>
    %39 = arith.addf %31, %38 : vector<1x1xf32>
    %c0_13 = arith.constant 0 : index
    %c0_14 = arith.constant 0 : index
    %40 = vector.load %arg6[%c0_13, %c0_14] : memref<1x1xf32, #tpu.memory_space<vmem>>, vector<1x1xf32>
    tpu.vector_store %arg6[%c0_13, %c0_14], %39 {strides = array<i32>} : memref<1x1xf32, #tpu.memory_space<vmem>>, vector<1x1xf32>,
    %cst_15 = arith.constant 0.00999999977 : f32
    %41 = vector.broadcast %cst_15 : f32 to vector<5x512xf32>
    %42 = arith.cmpf oge, %5, %41 : vector<5x512xf32>
    %43 = arith.extui %42 : vector<5x512xi1> to vector<5x512xi32>
    %44 = arith.sitofp %43 : vector<5x512xi32> to vector<5x512xf32>
    %45 = vector.broadcast %14 : vector<1x512xf32> to vector<5x512xf32>
    %46 = arith.mulf %44, %45 : vector<5x512xf32>
    %c0_16 = arith.constant 0 : index
    %c0_17 = arith.constant 0 : index
    %47 = vector.load %arg7[%c0_16, %c0_17] : memref<1x1xf32, #tpu.memory_space<vmem>>, vector<1x1xf32>
    %48 = arith.mulf %15, %46 : vector<5x512xf32>
    %49 = vector.shape_cast %48 : vector<5x512xf32> to vector<1x5x512xf32>
    %cst_18 = arith.constant dense<0.000000e+00> : vector<1xf32>
    %50 = vector.multi_reduction <add>, %49, %cst_18 [1, 2] : vector<1x5x512xf32> to vector<1xf32>
    %51 = vector.shape_cast %50 : vector<1xf32> to vector<1x1x1xf32>
    %52 = vector.extract %51[0, 0, 0] : f32 from vector<1x1x1xf32>
    %53 = vector.broadcast %52 : f32 to vector<1x1xf32>
    %54 = arith.addf %47, %53 : vector<1x1xf32>
    %c0_19 = arith.constant 0 : index
    %c0_20 = arith.constant 0 : index
    %55 = vector.load %arg7[%c0_19, %c0_20] : memref<1x1xf32, #tpu.memory_space<vmem>>, vector<1x1xf32>
    tpu.vector_store %arg7[%c0_19, %c0_20], %54 {strides = array<i32>} : memref<1x1xf32, #tpu.memory_space<vmem>>, vector<1x1xf32>,
    %c0_21 = arith.constant 0 : index
    %c0_22 = arith.constant 0 : index
    %56 = vector.load %arg8[%c0_21, %c0_22] : memref<1x1xf32, #tpu.memory_space<vmem>>, vector<1x1xf32>
    %57 = vector.shape_cast %46 : vector<5x512xf32> to vector<1x5x512xf32>
    %cst_23 = arith.constant dense<0.000000e+00> : vector<1xf32>
    %58 = vector.multi_reduction <add>, %57, %cst_23 [1, 2] : vector<1x5x512xf32> to vector<1xf32>
    %59 = vector.shape_cast %58 : vector<1xf32> to vector<1x1x1xf32>
    %60 = vector.extract %59[0, 0, 0] : f32 from vector<1x1x1xf32>
    %61 = vector.broadcast %60 : f32 to vector<1x1xf32>
    %62 = arith.addf %56, %61 : vector<1x1xf32>
    %c0_24 = arith.constant 0 : index
    %c0_25 = arith.constant 0 : index
    %63 = vector.load %arg8[%c0_24, %c0_25] : memref<1x1xf32, #tpu.memory_space<vmem>>, vector<1x1xf32>
    tpu.vector_store %arg8[%c0_24, %c0_25], %62 {strides = array<i32>} : memref<1x1xf32, #tpu.memory_space<vmem>>, vector<1x1xf32>,
    %c0_i32_26 = arith.constant 0 : i32
    %64 = arith.cmpi eq, %arg0, %c0_i32_26 : i32
    %65 = arith.extui %64 : i1 to i32
    %c0_i32_27 = arith.constant 0 : i32
    %66 = arith.cmpi ne, %65, %c0_i32_27 : i32
    scf.if %66 {
      %c-1_i32 = arith.constant -1 : i32
      %67 = arith.cmpi ne, %3, %c-1_i32 : i32
      %c0_28 = arith.constant 0 : index
      %c0_29 = arith.constant 0 : index
      %68 = vector.load %arg6[%c0_28, %c0_29] : memref<1x1xf32, #tpu.memory_space<vmem>>, vector<1x1xf32>
      %cst_30 = arith.constant 0.000000e+00 : f32
      %69 = vector.broadcast %cst_30 : f32 to vector<1x1xf32>
      %70 = arith.cmpf ogt, %68, %69 : vector<1x1xf32>
      %71 = vector.broadcast %67 : i1 to vector<1x1xi1>
      %72 = arith.andi %71, %70 : vector<1x1xi1>
      %c0_31 = arith.constant 0 : index
      %c0_32 = arith.constant 0 : index
      %73 = vector.load %arg5[%c0_31, %c0_32] : memref<1x1xf32, #tpu.memory_space<vmem>>, vector<1x1xf32>
      %c0_33 = arith.constant 0 : index
      %c0_34 = arith.constant 0 : index
      %74 = vector.load %arg7[%c0_33, %c0_34] : memref<1x1xf32, #tpu.memory_space<vmem>>, vector<1x1xf32>
      %75 = arith.select %72, %73, %74 : vector<1x1xi1>, vector<1x1xf32>
      %c0_35 = arith.constant 0 : index
      %c0_36 = arith.constant 0 : index
      %76 = vector.load %arg6[%c0_35, %c0_36] : memref<1x1xf32, #tpu.memory_space<vmem>>, vector<1x1xf32>
      %c0_37 = arith.constant 0 : index
      %c0_38 = arith.constant 0 : index
      %77 = vector.load %arg8[%c0_37, %c0_38] : memref<1x1xf32, #tpu.memory_space<vmem>>, vector<1x1xf32>
      %78 = arith.select %72, %76, %77 : vector<1x1xi1>, vector<1x1xf32>
      %79 = tpu.reciprocal %78 : vector<1x1xf32> -> vector<1x1xf32>
      %80 = arith.mulf %75, %79 : vector<1x1xf32>
      %cst_39 = arith.constant 1.000000e+00 : f32
      %81 = vector.broadcast %cst_39 : f32 to vector<1x1xf32>
      %82 = arith.subf %81, %80 : vector<1x1xf32>
      %c0_40 = arith.constant 0 : index
      %c0_41 = arith.constant 0 : index
      %83 = vector.load %arg4[%c0_40, %c0_41] : memref<1x1xf32, #tpu.memory_space<vmem>>, vector<1x1xf32>
      tpu.vector_store %arg4[%c0_40, %c0_41], %82 {strides = array<i32>} : memref<1x1xf32, #tpu.memory_space<vmem>>, vector<1x1xf32>,
    } else {
    }
    return
  }
  func.func @transform_0(%arg0: i32, %arg1: memref<2xi32, #tpu.memory_space<smem>>) -> (i32, i32) {
    %c0_i32 = arith.constant 0 : i32
    %c0_i32_0 = arith.constant 0 : i32
    return %c0_i32, %arg0 : i32, i32
  }
  func.func @transform_1(%arg0: i32, %arg1: memref<2xi32, #tpu.memory_space<smem>>) -> (i32, i32) {
    %c0_i32 = arith.constant 0 : i32
    %c0_i32_0 = arith.constant 0 : i32
    return %c0_i32, %arg0 : i32, i32
  }
  func.func @transform_2(%arg0: i32, %arg1: memref<2xi32, #tpu.memory_space<smem>>) -> (i32, i32) {
    %c0_i32 = arith.constant 0 : i32
    %c0_i32_0 = arith.constant 0 : i32
    %c0_i32_1 = arith.constant 0 : i32
    return %c0_i32, %c0_i32_0 : i32, i32
  }
}

</mosaic_0001>

<llo_original>
// kernel: tpu_custom_call.1
$region0: #{tpu_custom_call.1}
  #allocation0 [shape = 'u32[]', space=smem, size = 0x4, offset = 0x4, fixed_abs, tag = 'smem constant byte address 0x4 - core index']
  #allocation1 [shape = 'u32[144,128]{1,0:T(1,128)}', space=vmem, size = 0x12000, scoped, tag = 'internal scratch']
  #allocation2 [shape = 'f32[1,1]{1,0:T(1,128)}', space=vmem, size = 0x200, scoped, tag = 'scratch operand']
  #allocation3 [shape = 'f32[1,1]{1,0:T(1,128)}', space=vmem, size = 0x200, scoped, tag = 'scratch operand']
  #allocation4 [shape = 'f32[1,1]{1,0:T(1,128)}', space=vmem, size = 0x200, scoped, tag = 'scratch operand']
  #allocation5 [shape = 'f32[1,1]{1,0:T(1,128)}', space=vmem, size = 0x200, scoped, tag = 'scratch operand']
  #allocation6 [shape = 's32[1]{0}', space=sflag, size = 0x4, scoped, tag = 'scoped memory for tpu_custom_call.1']
  #allocation7 [shape = 'u8[512]{0}', space=smem, size = 0x200, scoped, tag = 'prefetched SMEM operand 0']
  %s0 = inlined_call_operand.hbm [shape: s32[2], index: 0, kind: input, shape index: {}]
  %s1 = inlined_call_operand.hbm [shape: f32[5,512], index: 1, kind: input, shape index: {}]
  %s2 = inlined_call_operand.vmem [shape: s32[1,512], index: 2, kind: input, shape index: {}]
  %s3 = inlined_call_operand.hbm [shape: f32[1,1], index: 3, kind: output, shape index: {}]
  %s4 = sld [smem:[#allocation0]]
  $region30: #{tpu_custom_call.1} parent=0
    _
  %s6 = ssub.s32 1, %s4
  %s7 = scalar_select 0, %s6, %s4
  %9 = dma.hbm_to_smem %s0, 16, [#allocation7], [#allocation6]
  %10 = dma.done [#allocation6], 16
  %11 = sfence
  $region1: #{tpu_custom_call.1} parent=0
    #allocation8 [shape = 'u8[16384]{0}', space=vmem, size = 0x4000, scoped, tag = 'input window, operand 1, single buffered']
    #allocation9 [shape = 's32[1]{0}', space=sflag, size = 0x4, scoped, tag = 'scoped memory for tpu_custom_call.1']
    #allocation10 [shape = 's32[1]{0}', space=sflag, size = 0x4, scoped, tag = 'scoped memory for tpu_custom_call.1']
    #allocation11 [shape = 'u8[512]{0}', space=vmem, size = 0x400, scoped, tag = 'output window, operand 0, single buffered']
    %12 = vsyncpa [#allocation9], 0
    %13 = vsyncpa [#allocation10], 0
    // Predicated region
    $region2: #{tpu_custom_call.1} parent=1 // pred_check
      _
    $region3: #{tpu_custom_call.1} parent=1 // pred_check_branch
      %15 = sbr.rel (0) target = $region5
    $region4: #{tpu_custom_call.1} parent=1 // pred_region
      %s17 = ssub.s32 512, 512
      %18 = vsyncadd [#allocation9], %s17
      %s20 = sshll.u32 [#allocation8], 4
      %s21 = int_to_ptr.vmem [resolvable:$true] %s20
      %23 = dma.hbm_to_vmem [thread:$0]  %s1, 512, %s21, [#allocation9]
    $region5: #{tpu_custom_call.1} parent=1 // pred_fallthru
      _
    // Predicated region
    $region6: #{tpu_custom_call.1} parent=1 // pred_check
      _
    $region7: #{tpu_custom_call.1} parent=1 // pred_check_branch
      %25 = sbr.rel (0) target = $region9
    $region8: #{tpu_custom_call.1} parent=1 // pred_region
      _
    $region9: #{tpu_custom_call.1} parent=1 // pred_fallthru
      _
    // Predicated region
    $region10: #{tpu_custom_call.1} parent=1 // pred_check
      _
    $region11: #{tpu_custom_call.1} parent=1 // pred_check_branch
      %27 = sbr.rel (0) target = $region13
    $region12: #{tpu_custom_call.1} parent=1 // pred_region
      %28 = dma.done [#allocation9], 512
    $region13: #{tpu_custom_call.1} parent=1 // pred_fallthru
      _
    %p29 = scmp.eq.s32.totalorder 0, 0
    // Predicated region
    $region14: #{tpu_custom_call.1} parent=1 // pred_check
      %p30 = pneg %p29
    $region15: #{tpu_custom_call.1} parent=1 // pred_check_branch
      %32 = sbr.rel (%p30) target = $region17
    $region16: #{tpu_custom_call.1} parent=1 // pred_region
      %vm33 = vcmask 0
      %34 = vst.msk [vmem:[#allocation2] sm:$0x1] %vm33, 0.0
      %35 = vst.msk [vmem:[#allocation3] sm:$0x1] %vm33, 0.0
      %36 = vst.msk [vmem:[#allocation4] sm:$0x1] %vm33, 0.0
      %37 = vst.msk [vmem:[#allocation5] sm:$0x1] %vm33, 0.0
    $region17: #{tpu_custom_call.1} parent=1 // pred_fallthru
      _
    %s38 = sld [smem:[#allocation7]]
    %s39 = sld [smem:[#allocation7 + $0x1]]
    %v40 = vld [vmem:[#allocation8] sm:$0x1f]
    %v41 = vld [vmem:[#allocation8 + $0x8] sm:$0x1f]
    %v42 = vld [vmem:[#allocation8 + $0x10] sm:$0x1f]
    %v43 = vld [vmem:[#allocation8 + $0x18] sm:$0x1f]
    %v44 = vld [vmem:[%s2] sm:$0xf]
    %v45 = vlaneseq
    %v46 = vand.u32 %v45, 127
    %v47 = vadd.s32 %v46, 128
    %v48 = vadd.s32 %v46, 256
    %v49 = vadd.s32 %v46, 384
    %s50 = smul.u32 0, 512
    %v51 = vstv %s50
    %v52 = vadd.s32 %v46, %v51
    %v53 = vadd.s32 %v47, %v51
    %v54 = vadd.s32 %v48, %v51
    %v55 = vadd.s32 %v49, %v51
    %v56 = vstv %s39
    %vm57 = vcmp.lt.s32.totalorder %v52, %v56
    %vm58 = vcmp.lt.s32.totalorder %v53, %v56
    %vm59 = vcmp.lt.s32.totalorder %v54, %v56
    %vm60 = vcmp.lt.s32.totalorder %v55, %v56
    %v61 = vsel %vm57, 1, 0
    %v62 = vsel %vm58, 1, 0
    %v63 = vsel %vm59, 1, 0
    %v64 = vsel %vm60, 1, 0
    %v65 = vcvt.s32.f32 %v61
    %v66 = vcvt.s32.f32 %v62
    %v67 = vcvt.s32.f32 %v63
    %v68 = vcvt.s32.f32 %v64
    %v69 = vmul.f32 %v40, %v40
    %v70 = vmul.f32 %v41, %v41
    %v71 = vmul.f32 %v42, %v42
    %v72 = vmul.f32 %v43, %v43
    %v73 = vstv %s38
    %vm74 = vcmp.eq.s32.totalorder %v44, %v73
    %v75 = vsel %vm74, 1, 0
    %v76 = vcvt.s32.f32 %v75
    %v81 = vcombine.low %v65, %v66
    %v82 = vcombine.low %v67, %v68
    %v84 = vunpack.c.l.s4 1966171168
    %v85 = vunpack.c.0.s8 %v84
    %v86 = vlaneseq
    %v87 = vshrl.u32 %v86, 7
    %v88 = vsub.s32 %v85, %v87
    %v89 = vrot.slane %v81, %v88
    %v91 = vunpack.c.l.s4 1966171168
    %v92 = vunpack.c.0.s8 %v91
    %v93 = vlaneseq
    %v94 = vshrl.u32 %v93, 7
    %v95 = vsub.s32 %v92, %v94
    %v96 = vrot.slane %v82, %v95
    %v97 = vcombine.low %v89, %v96
    %v99 = vunpack.c.l.s4 1966171168
    %v100 = vunpack.c.0.s8 %v99
    %v101 = vlaneseq
    %v102 = vshrl.u32 %v101, 7
    %v103 = vsub.s32 %v100, %v102
    %v104 = vrot.slane %v97, %v103
    %v106 = vmul.f32 %v76, %v104
    %v107 = vld [vmem:[#allocation2] sm:$0x1]
    %v109 = vlaneseq
    %v110 = vshrl.u32 %v109, 7
    %v111 = vsub.s32 0, %v110
    %v112 = vrot.slane %v106, %v111
    %v113 = vlaneseq
    %v114 = vshrl.u32 %v113, 7
    %v115 = vsub.s32 1, %v114
    %v116 = vrot.slane %v106, %v115
    %v117 = vlaneseq
    %v118 = vshrl.u32 %v117, 7
    %v119 = vsub.s32 2, %v118
    %v120 = vrot.slane %v106, %v119
    %v121 = vlaneseq
    %v122 = vshrl.u32 %v121, 7
    %v123 = vsub.s32 3, %v122
    %v124 = vrot.slane %v106, %v123
    %v129 = vmul.f32 %v69, %v112
    %v130 = vmul.f32 %v70, %v116
    %v131 = vmul.f32 %v71, %v120
    %v132 = vmul.f32 %v72, %v124
    %vm133 = vcmask 1044480
    %v134 = vsel %vm133, %v129, 0.0
    %v135 = vsel %vm133, %v130, 0.0
    %v136 = vadd.f32 %v134, %v135
    %v137 = vsel %vm133, %v131, 0.0
    %v138 = vadd.f32 %v136, %v137
    %v139 = vsel %vm133, %v132, 0.0
    %v140 = vadd.f32 %v138, %v139
    %141 = vadd.xlane.f32.xlu0 %v140
    %v142 = vpop.xlane.xlu0 %141
    %v143 = vrot.slane %v142, 4
    %v144 = vadd.f32 %v142, %v143
    %v145 = vrot.slane %v144, 2
    %v146 = vadd.f32 %v144, %v145
    %v147 = vrot.slane %v146, 1
    %v148 = vadd.f32 %v146, %v147
    %s149 = vtos %v148
    %v150 = vstv %s149
    %v151 = vadd.f32 %v107, %v150
    %vm152 = vcmask 0
    %153 = vst.msk [vmem:[#allocation2] sm:$0x1] %vm152, %v151
    %v154 = vld [vmem:[#allocation3] sm:$0x1]
    %vm155 = vcmask 1040384
    %v156 = vsel %vm155, %v112, 0.0
    %v157 = vsel %vm155, %v116, 0.0
    %v158 = vadd.f32 %v156, %v157
    %v159 = vsel %vm155, %v120, 0.0
    %v160 = vadd.f32 %v158, %v159
    %v161 = vsel %vm155, %v124, 0.0
    %v162 = vadd.f32 %v160, %v161
    %163 = vadd.xlane.f32.xlu0 %v162
    %v164 = vpop.xlane.xlu0 %163
    %v165 = vrot.slane %v164, 4
    %v166 = vadd.f32 %v164, %v165
    %v167 = vrot.slane %v166, 2
    %v168 = vadd.f32 %v166, %v167
    %v169 = vrot.slane %v168, 1
    %v170 = vadd.f32 %v168, %v169
    %s171 = vtos %v170
    %v172 = vstv %s171
    %v173 = vmul.f32 %v172, 5.0
    %v174 = vadd.f32 %v154, %v173
    %175 = vst.msk [vmem:[#allocation3] sm:$0x1] %vm152, %v174
    %vm176 = vcmp.ge.f32.partialorder %v40, 0.01
    %vm177 = vcmp.ge.f32.partialorder %v41, 0.01
    %vm178 = vcmp.ge.f32.partialorder %v42, 0.01
    %vm179 = vcmp.ge.f32.partialorder %v43, 0.01
    %v180 = vsel %vm176, 1, 0
    %v181 = vsel %vm177, 1, 0
    %v182 = vsel %vm178, 1, 0
    %v183 = vsel %vm179, 1, 0
    %v184 = vcvt.s32.f32 %v180
    %v185 = vcvt.s32.f32 %v181
    %v186 = vcvt.s32.f32 %v182
    %v187 = vcvt.s32.f32 %v183
    %v188 = vmul.f32 %v184, %v65
    %v189 = vmul.f32 %v185, %v66
    %v190 = vmul.f32 %v186, %v67
    %v191 = vmul.f32 %v187, %v68
    %v192 = vld [vmem:[#allocation4] sm:$0x1]
    %v193 = vmul.f32 %v69, %v188
    %v194 = vmul.f32 %v70, %v189
    %v195 = vmul.f32 %v71, %v190
    %v196 = vmul.f32 %v72, %v191
    %v197 = vsel %vm133, %v193, 0.0
    %v198 = vsel %vm133, %v194, 0.0
    %v199 = vadd.f32 %v197, %v198
    %v200 = vsel %vm133, %v195, 0.0
    %v201 = vadd.f32 %v199, %v200
    %v202 = vsel %vm133, %v196, 0.0
    %v203 = vadd.f32 %v201, %v202
    %204 = vadd.xlane.f32.xlu0 %v203
    %v205 = vpop.xlane.xlu0 %204
    %v206 = vrot.slane %v205, 4
    %v207 = vadd.f32 %v205, %v206
    %v208 = vrot.slane %v207, 2
    %v209 = vadd.f32 %v207, %v208
    %v210 = vrot.slane %v209, 1
    %v211 = vadd.f32 %v209, %v210
    %s212 = vtos %v211
    %v213 = vstv %s212
    %v214 = vadd.f32 %v192, %v213
    %215 = vst.msk [vmem:[#allocation4] sm:$0x1] %vm152, %v214
    %v216 = vld [vmem:[#allocation5] sm:$0x1]
    %v217 = vsel %vm133, %v188, 0.0
    %v218 = vsel %vm133, %v189, 0.0
    %v219 = vadd.f32 %v217, %v218
    %v220 = vsel %vm133, %v190, 0.0
    %v221 = vadd.f32 %v219, %v220
    %v222 = vsel %vm133, %v191, 0.0
    %v223 = vadd.f32 %v221, %v222
    %224 = vadd.xlane.f32.xlu0 %v223
    %v225 = vpop.xlane.xlu0 %224
    %v226 = vrot.slane %v225, 4
    %v227 = vadd.f32 %v225, %v226
    %v228 = vrot.slane %v227, 2
    %v229 = vadd.f32 %v227, %v228
    %v230 = vrot.slane %v229, 1
    %v231 = vadd.f32 %v229, %v230
    %s232 = vtos %v231
    %v233 = vstv %s232
    %v234 = vadd.f32 %v216, %v233
    %235 = vst.msk [vmem:[#allocation5] sm:$0x1] %vm152, %v234
    // Predicated region
    $region18: #{tpu_custom_call.1} parent=1 // pred_check
      %p236 = pneg %p29
    $region19: #{tpu_custom_call.1} parent=1 // pred_check_branch
      %238 = sbr.rel (%p236) target = $region21
    $region20: #{tpu_custom_call.1} parent=1 // pred_region
      %p239 = scmp.ne.s32.totalorder %s38, 4294967295
      %v240 = vld [vmem:[#allocation3] sm:$0x1]
      %vm241 = vcmp.gt.f32.partialorder %v240, 0.0
      %s242 = scalar_select %p239, 1, 0
      %v243 = vstv %s242
      %vm244 = vcmp.eq.s32.totalorder %v243, 1
      %vm245 = vmand %vm244, %vm241
      %v246 = vld [vmem:[#allocation2] sm:$0x1]
      %v247 = vld [vmem:[#allocation4] sm:$0x1]
      %v248 = vsel %vm245, %v246, %v247
      %v249 = vld [vmem:[#allocation5] sm:$0x1]
      %v250 = vsel %vm245, %v240, %v249
      %v251 = vrcp.pop %v250
      %v252 = vmul.f32 %v248, %v251
      %v253 = vsub.f32 1.0, %v252
      %254 = vst.msk [vmem:[#allocation11] sm:$0x1] %vm152, %v253
    $region21: #{tpu_custom_call.1} parent=1 // pred_fallthru
      _
    // Predicated region
    $region22: #{tpu_custom_call.1} parent=1 // pred_check
      _
    $region23: #{tpu_custom_call.1} parent=1 // pred_check_branch
      %256 = sbr.rel (0) target = $region25
    $region24: #{tpu_custom_call.1} parent=1 // pred_region
      %s258 = ssub.s32 16, 16
      %259 = vsyncadd [#allocation10], %s258
      %s261 = sshll.u32 [#allocation11], 4
      %s262 = int_to_ptr.vmem [resolvable:$true] %s261
      %264 = dma.vmem_to_hbm [thread:$0]  %s262, 16, %s3, [#allocation10]
    $region25: #{tpu_custom_call.1} parent=1 // pred_fallthru
      _
    // Predicated region
    $region26: #{tpu_custom_call.1} parent=1 // pred_check
      _
    $region27: #{tpu_custom_call.1} parent=1 // pred_check_branch
      %266 = sbr.rel (0) target = $region29
    $region28: #{tpu_custom_call.1} parent=1 // pred_region
      %267 = dma.done [#allocation10], 16
    $region29: #{tpu_custom_call.1} parent=1 // pred_fallthru
      _
    %268 = vsyncpa [#allocation9], 1
    %269 = vsyncpa [#allocation10], 1

</llo_original>
